<compile_context>
chip_gen: v7x
topology: tpu7x:2x2x1
jax: 0.10.0
libtpu: 0.0.40
codegen_flags: <defaults>
</compile_context>

<pallas_src>
import jax
import jax.numpy as jnp
from jax.experimental import pallas as pl
from jax.experimental.pallas import tpu as pltpu


def _dice_partial_sums_kernel(pred_ref, tgt_ref, sums_ref):
    """Per (image, h-row) partial sums over the w (lane) axis.

    pred_ref / tgt_ref : (bn, w) blocks of the (n*h, w) input views.
    sums_ref           : (bn, 3) block: [:,0]=sum(p^2)  [:,1]=sum(t)  [:,2]=sum(t*p)
    """
    x = pred_ref[...].astype(jnp.float32)
    # sigmoid(x) == 0.5*tanh(0.5*x) + 0.5 : one EUP op instead of exp + reciprocal.
    p = 0.5 * jnp.tanh(0.5 * x) + 0.5
    t = (tgt_ref[...].astype(jnp.float32) == 1.0).astype(jnp.float32)

    sums_ref[:, 0:1] = jnp.sum(p * p, axis=-1, keepdims=True)
    sums_ref[:, 1:2] = jnp.sum(t, axis=-1, keepdims=True)      # t is 0/1: t*t == t
    sums_ref[:, 2:3] = jnp.sum(t * p, axis=-1, keepdims=True)


def _sublane_multiple(dtype):
    # Dense vreg packing: 8 rows for 32-bit, 16 for bf16/f16, 32 for 8-bit dtypes.
    return max(8, 32 // jnp.dtype(dtype).itemsize)


def _choose_row_block(rows, w, pred_dtype, tgt_dtype, budget_bytes=4 * 1024 * 1024):
    """Row-block size: ~4 MiB per input block, >= 2 parallel blocks when possible."""
    sub = max(_sublane_multiple(pred_dtype), _sublane_multiple(tgt_dtype))
    w_pad = pl.cdiv(w, 128) * 128
    max_item = max(jnp.dtype(pred_dtype).itemsize, jnp.dtype(tgt_dtype).itemsize)

    bn = budget_bytes // (w_pad * max_item)
    bn = max(sub, (bn // sub) * sub)
    if rows >= 2 * sub:
        # Guarantee >= 2 "parallel" row blocks so both v7x TensorCores get work.
        cap = pl.cdiv(pl.cdiv(rows, 2), sub) * sub
        bn = min(bn, cap)
    if bn >= rows:
        bn = rows  # full-axis block (always legal)
    return bn


def weighted_dice_loss_pallas(prediction, target_seg, weighted_val=1.0,
                              reduction="sum", eps=1e-8, block_rows=None):
    n, h, w = target_seg.shape
    rows = n * h

    # Leading-dims-only flatten: (n, h, w) -> (n*h, w).  The HBM (8,128) tiling on
    # the last two dims is unchanged when h % 8 == 0, so this lowers to a bitcast.
    pred2 = prediction.reshape(-1, w)
    tgt2 = target_seg.reshape(-1, w)
    assert pred2.shape == (rows, w), "prediction must flatten to target's (n*h, w)"
    assert tgt2.shape == (rows, w)

    if block_rows is None:
        bn = _choose_row_block(rows, w, pred2.dtype, tgt2.dtype)
    else:
        bn = min(int(block_rows), rows)
        if bn < rows:                       # keep the (8,128) rule satisfied
            bn = min(rows, pl.cdiv(bn, 8) * 8)

    r_blocks = pl.cdiv(rows, bn)
    rows_pad = r_blocks * bn

    bytes_in = rows * w * (pred2.dtype.itemsize + tgt2.dtype.itemsize)
    cost = pl.CostEstimate(
        flops=6 * rows * w,
        transcendentals=rows * w,           # one tanh per element
        bytes_accessed=bytes_in + rows_pad * 3 * 4,
    )

    sums = pl.pallas_call(
        _dice_partial_sums_kernel,
        out_shape=jax.ShapeDtypeStruct((rows_pad, 3), jnp.float32),
        grid_spec=pltpu.PrefetchScalarGridSpec(
            num_scalar_prefetch=0,
            grid=(r_blocks,),                                   # fully parallel
            in_specs=[
                pl.BlockSpec((bn, w), lambda i: (i, 0)),
                pl.BlockSpec((bn, w), lambda i: (i, 0)),
            ],
            out_specs=pl.BlockSpec((bn, 3), lambda i: (i, 0)),  # written once
        ),
        compiler_params=pltpu.CompilerParams(
            dimension_semantics=("parallel",),
            vmem_limit_bytes=48 * 1024 * 1024,
        ),
        cost_estimate=cost,
    )(pred2, tgt2)

    # Tiny O(n*h) epilogue in plain JAX: drop padded rows, sum over h, dice divide.
    per_img = sums[:rows].reshape(n, h, 3).sum(axis=1)
    p2, tsum, tp = per_img[:, 0], per_img[:, 1], per_img[:, 2]
    loss = (1.0 - 2.0 * tp / jnp.maximum(p2 + tsum, eps)) * weighted_val

    if reduction == "sum":
        return jnp.sum(loss) / n
    elif reduction == "mean":
        return jnp.mean(loss)
    return loss  # PyTorch fall-through: per-image (already weighted) loss vector


class WeightedDiceLoss:
    """JAX/Pallas port of the PyTorch WeightedDiceLoss module (no parameters)."""

    def __init__(self, weighted_val: float = 1.0, reduction: str = "sum"):
        self.weighted_val = weighted_val
        self.reduction = reduction

    def __call__(self, prediction, target_seg):
        return weighted_dice_loss_pallas(
            prediction, target_seg, self.weighted_val, self.reduction
        )


def _reference(prediction, target_seg, weighted_val=1.0, reduction="sum", eps=1e-8):
    n, h, w = target_seg.shape
    tgt = (target_seg.astype(jnp.float32) == 1.0).astype(jnp.float32).reshape(-1, h * w)
    pred = jax.nn.sigmoid(prediction.reshape(-1, h * w).astype(jnp.float32))
    loss_part = jnp.sum(pred ** 2, axis=-1) + jnp.sum(tgt ** 2, axis=-1)
    loss = 1 - 2 * jnp.sum(tgt * pred, axis=-1) / jnp.maximum(loss_part, eps)
    loss = loss * weighted_val
    if reduction == "sum":
        return jnp.sum(loss) / n
    if reduction == "mean":
        return jnp.mean(loss)
    return loss


if __name__ == "__main__":
    key = jax.random.PRNGKey(0)
    k1, k2, k3, k4 = jax.random.split(key, 4)

    # Case 1: module-default shapes (n, h, w) f32, 'sum' reduction, auto tiling
    # (rows = n*h = 32 splits into 2 parallel row blocks).
    n, h, w = 2, 16, 16
    prediction = jax.random.normal(k1, (n, h, w), dtype=jnp.float32)
    target_seg = jax.random.randint(k2, (n, h, w), 0, 2).astype(jnp.float32)

    loss_fn = WeightedDiceLoss(weighted_val=1.0, reduction="sum")
    loss = loss_fn(prediction, target_seg)
    jax.block_until_ready(loss)
    ref = _reference(prediction, target_seg, 1.0, "sum")
    assert jnp.allclose(loss, ref, atol=1e-4, rtol=1e-4), (loss, ref)

    # Case 2: bf16 prediction AND bf16 target (narrow HBM streams), h % 8 != 0,
    # forced small row blocks so the multi-block grid + partial last row block
    # (epilogue slicing) paths are exercised.
    n2, h2, w2 = 16, 17, 16
    pred_b = jax.random.normal(k3, (n2, h2, w2), dtype=jnp.float32).astype(jnp.bfloat16)
    tgt_b = jax.random.randint(k4, (n2, h2, w2), 0, 2).astype(jnp.bfloat16)
    loss2 = weighted_dice_loss_pallas(pred_b, tgt_b, weighted_val=0.5,
                                      reduction="mean", block_rows=32)
    jax.block_until_ready(loss2)
    ref2 = _reference(pred_b, tgt_b, 0.5, "mean")
    assert jnp.allclose(loss2, ref2, atol=1e-3, rtol=1e-3), (loss2, ref2)

    # Case 3: 'none'-style fall-through returns the per-image loss vector.
    loss3 = weighted_dice_loss_pallas(prediction, target_seg, reduction="none")
    jax.block_until_ready(loss3)
    ref3 = _reference(prediction, target_seg, 1.0, "none")
    assert jnp.allclose(loss3, ref3, atol=1e-4, rtol=1e-4), (loss3, ref3)

    print("KERNEL_OK")
</pallas_src>

<mosaic_0001>
module attributes {stable_mosaic.version = 11 : i64} {
  func.func @_dice_partial_sums_kernel(%arg0: i32, %arg1: memref<16x16xf32, #tpu.memory_space<vmem>>, %arg2: memref<16x16xf32, #tpu.memory_space<vmem>>, %arg3: memref<16x3xf32, #tpu.memory_space<vmem>>) attributes {dimension_semantics = [#tpu.dimension_semantics<parallel>], iteration_bounds = array<i64: 2>, scalar_prefetch = 0 : i64, scratch_operands = 0 : i64, tpu.core_type = #tpu.core_type<tc>, window_params = [{transform_indices = @transform_0, window_bounds = array<i64: 16, 16>}, {transform_indices = @transform_1, window_bounds = array<i64: 16, 16>}, {transform_indices = @transform_2, window_bounds = array<i64: 16, 3>}]} {
    %c0 = arith.constant 0 : index
    %c0_0 = arith.constant 0 : index
    %0 = vector.load %arg1[%c0, %c0_0] : memref<16x16xf32, #tpu.memory_space<vmem>>, vector<16x16xf32>
    %cst = arith.constant 5.000000e-01 : f32
    %1 = vector.broadcast %cst : f32 to vector<16x16xf32>
    %2 = arith.mulf %1, %0 : vector<16x16xf32>
    %3 = math.tanh %2 : vector<16x16xf32>
    %cst_1 = arith.constant 5.000000e-01 : f32
    %4 = vector.broadcast %cst_1 : f32 to vector<16x16xf32>
    %5 = arith.mulf %4, %3 : vector<16x16xf32>
    %cst_2 = arith.constant 5.000000e-01 : f32
    %6 = vector.broadcast %cst_2 : f32 to vector<16x16xf32>
    %7 = arith.addf %5, %6 : vector<16x16xf32>
    %c0_3 = arith.constant 0 : index
    %c0_4 = arith.constant 0 : index
    %8 = vector.load %arg2[%c0_3, %c0_4] : memref<16x16xf32, #tpu.memory_space<vmem>>, vector<16x16xf32>
    %cst_5 = arith.constant 1.000000e+00 : f32
    %9 = vector.broadcast %cst_5 : f32 to vector<16x16xf32>
    %10 = arith.cmpf oeq, %8, %9 : vector<16x16xf32>
    %11 = arith.extui %10 : vector<16x16xi1> to vector<16x16xi32>
    %12 = arith.sitofp %11 : vector<16x16xi32> to vector<16x16xf32>
    %13 = arith.mulf %7, %7 : vector<16x16xf32>
    %cst_6 = arith.constant dense<0.000000e+00> : vector<16xf32>
    %14 = vector.multi_reduction <add>, %13, %cst_6 [1] : vector<16x16xf32> to vector<16xf32>
    %15 = vector.shape_cast %14 : vector<16xf32> to vector<16x1xf32>
    %c0_7 = arith.constant 0 : index
    %c0_8 = arith.constant 0 : index
    %16 = vector.load %arg3[%c0_7, %c0_8] : memref<16x3xf32, #tpu.memory_space<vmem>>, vector<16x1xf32>
    tpu.vector_store %arg3[%c0_7, %c0_8], %15 {strides = array<i32>} : memref<16x3xf32, #tpu.memory_space<vmem>>, vector<16x1xf32>,
    %cst_9 = arith.constant dense<0.000000e+00> : vector<16xf32>
    %17 = vector.multi_reduction <add>, %12, %cst_9 [1] : vector<16x16xf32> to vector<16xf32>
    %18 = vector.shape_cast %17 : vector<16xf32> to vector<16x1xf32>
    %c0_10 = arith.constant 0 : index
    %c1 = arith.constant 1 : index
    %19 = vector.load %arg3[%c0_10, %c1] : memref<16x3xf32, #tpu.memory_space<vmem>>, vector<16x1xf32>
    tpu.vector_store %arg3[%c0_10, %c1], %18 {strides = array<i32>} : memref<16x3xf32, #tpu.memory_space<vmem>>, vector<16x1xf32>,
    %20 = arith.mulf %12, %7 : vector<16x16xf32>
    %cst_11 = arith.constant dense<0.000000e+00> : vector<16xf32>
    %21 = vector.multi_reduction <add>, %20, %cst_11 [1] : vector<16x16xf32> to vector<16xf32>
    %22 = vector.shape_cast %21 : vector<16xf32> to vector<16x1xf32>
    %c0_12 = arith.constant 0 : index
    %c2 = arith.constant 2 : index
    %23 = vector.load %arg3[%c0_12, %c2] : memref<16x3xf32, #tpu.memory_space<vmem>>, vector<16x1xf32>
    tpu.vector_store %arg3[%c0_12, %c2], %22 {strides = array<i32>} : memref<16x3xf32, #tpu.memory_space<vmem>>, vector<16x1xf32>,
    return
  }
  func.func @transform_0(%arg0: i32) -> (i32, i32) {
    %c0_i32 = arith.constant 0 : i32
    %c0_i32_0 = arith.constant 0 : i32
    return %arg0, %c0_i32 : i32, i32
  }
  func.func @transform_1(%arg0: i32) -> (i32, i32) {
    %c0_i32 = arith.constant 0 : i32
    %c0_i32_0 = arith.constant 0 : i32
    return %arg0, %c0_i32 : i32, i32
  }
  func.func @transform_2(%arg0: i32) -> (i32, i32) {
    %c0_i32 = arith.constant 0 : i32
    %c0_i32_0 = arith.constant 0 : i32
    return %arg0, %c0_i32 : i32, i32
  }
}

</mosaic_0001>

<llo_original>
// kernel: tpu_custom_call.1
$region0: #{tpu_custom_call.1}
  #allocation0 [shape = 'u32[]', space=smem, size = 0x4, offset = 0x4, fixed_abs, tag = 'smem constant byte address 0x4 - core index']
  #allocation1 [shape = 'u32[144,128]{1,0:T(1,128)}', space=vmem, size = 0x12000, scoped, tag = 'internal scratch']
  %s0 = inlined_call_operand.vmem [shape: f32[32,16], index: 0, kind: input, shape index: {}]
  %s1 = inlined_call_operand.vmem [shape: f32[32,16], index: 1, kind: input, shape index: {}]
  %s2 = inlined_call_operand.vmem [shape: f32[32,3], index: 2, kind: output, shape index: {}]
  %s3 = sld [smem:[#allocation0]]
  $region41: #{tpu_custom_call.1} parent=0
    _
  %s5 = ssub.s32 1, %s3
  %s6 = scalar_select 0, %s5, %s3
  loop: start=0, step=1, limit=4
  $region2: #{tpu_custom_call.1} parent=0 // loop_pre_header
    _
  $region3: #{tpu_custom_call.1} parent=0 // loop_header
    %s8 = sphi 0, %s12
    %p9 = scmp.ge.s32.totalorder %s8, 4
    %s18 = sphi 0, %s20
    %s21 = sphi 0, %s18
    %s22 = sphi 0, %s21
    %s38 = sphi 0, %s22
    %s44 = sphi 0, %s46
    %s47 = sphi 0, %s44
    %s48 = sphi 0, %s47
    %s64 = sphi 0, %s48
    %s70 = sphi 0, %s72
    %s73 = sphi 0, %s70
    %s74 = sphi 0, %s73
    %s90 = sphi 0, %s74
  $region4: #{tpu_custom_call.1} parent=0 // loop_header_branch
    %11 = sbr.rel (%p9) target = $region8
  $region5: #{tpu_custom_call.1} parent=0 // loop_body
    %s13 = ssub.s32 %s8, 1
    %s14 = ssub.s32 %s8, 2
    %s15 = sadd.s32 %s8, 1
    %s16 = ssub.s32 %s8, %s15
    %p17 = scmp.eq.s32.totalorder %s16, 0
    %s19 = sadd.s32 %s18, 1
    %s20 = scalar_select %p17, %s18, %s19
    %p23 = pneg %p17
    %p24 = scmp.eq.s32.totalorder %s8, 1
    %p25 = por %p23, %p24
    %p26 = scmp.ne.s32.totalorder %s18, %s21
    %p27 = scmp.eq.s32.totalorder %s8, 0
    %p28 = por %p26, %p27
    %p29 = scmp.ne.s32.totalorder %s18, %s21
    %p30 = scmp.eq.s32.totalorder %s13, 1
    %p31 = por %p29, %p30
    %p32 = scmp.ne.s32.totalorder %s21, %s22
    %p33 = scmp.eq.s32.totalorder %s13, 0
    %p34 = por %p32, %p33
    %p35 = scmp.ne.s32.totalorder %s21, %s22
    %p36 = scmp.eq.s32.totalorder %s14, 1
    %p37 = por %p35, %p36
    %p39 = scmp.ne.s32.totalorder %s22, %s38
    %p40 = scmp.eq.s32.totalorder %s14, 0
    %p41 = por %p39, %p40
    %s42 = ssub.s32 %s8, %s15
    %p43 = scmp.eq.s32.totalorder %s42, 0
    %s45 = sadd.s32 %s44, 1
    %s46 = scalar_select %p43, %s44, %s45
    %p49 = pneg %p43
    %p50 = scmp.eq.s32.totalorder %s8, 1
    %p51 = por %p49, %p50
    %p52 = scmp.ne.s32.totalorder %s44, %s47
    %p53 = scmp.eq.s32.totalorder %s8, 0
    %p54 = por %p52, %p53
    %p55 = scmp.ne.s32.totalorder %s44, %s47
    %p56 = scmp.eq.s32.totalorder %s13, 1
    %p57 = por %p55, %p56
    %p58 = scmp.ne.s32.totalorder %s47, %s48
    %p59 = scmp.eq.s32.totalorder %s13, 0
    %p60 = por %p58, %p59
    %p61 = scmp.ne.s32.totalorder %s47, %s48
    %p62 = scmp.eq.s32.totalorder %s14, 1
    %p63 = por %p61, %p62
    %p65 = scmp.ne.s32.totalorder %s48, %s64
    %p66 = scmp.eq.s32.totalorder %s14, 0
    %p67 = por %p65, %p66
    %s68 = ssub.s32 %s8, %s15
    %p69 = scmp.eq.s32.totalorder %s68, 0
    %s71 = sadd.s32 %s70, 1
    %s72 = scalar_select %p69, %s70, %s71
    %p75 = pneg %p69
    %p76 = scmp.eq.s32.totalorder %s8, 1
    %p77 = por %p75, %p76
    %p78 = scmp.ne.s32.totalorder %s70, %s73
    %p79 = scmp.eq.s32.totalorder %s8, 0
    %p80 = por %p78, %p79
    %p81 = scmp.ne.s32.totalorder %s70, %s73
    %p82 = scmp.eq.s32.totalorder %s13, 1
    %p83 = por %p81, %p82
    %p84 = scmp.ne.s32.totalorder %s73, %s74
    %p85 = scmp.eq.s32.totalorder %s13, 0
    %p86 = por %p84, %p85
    %p87 = scmp.ne.s32.totalorder %s73, %s74
    %p88 = scmp.eq.s32.totalorder %s14, 1
    %p89 = por %p87, %p88
    %p91 = scmp.ne.s32.totalorder %s74, %s90
    %p92 = scmp.eq.s32.totalorder %s14, 0
    %p93 = por %p91, %p92
    %p94 = scmp.le.s32.totalorder 1, %s8
    %p95 = scmp.lt.s32.totalorder %s8, 3
    %p96 = pnand %p94, %p95
    %p97 = pneg %p96
    // Predicated region
    $region9: #{tpu_custom_call.1} parent=5 // pred_check
      _
    $region10: #{tpu_custom_call.1} parent=5 // pred_check_branch
      %99 = sbr.rel (%p96) target = $region12
    $region11: #{tpu_custom_call.1} parent=5 // pred_region
      %s100 = ssub.s32 %s8, 1
    $region12: #{tpu_custom_call.1} parent=5 // pred_fallthru
      _
    %p101 = scmp.lt.s32.totalorder %s8, 2
    // Predicated region
    $region13: #{tpu_custom_call.1} parent=5 // pred_check
      %p102 = pneg %p101
    $region14: #{tpu_custom_call.1} parent=5 // pred_check_branch
      %104 = sbr.rel (%p102) target = $region16
    $region15: #{tpu_custom_call.1} parent=5 // pred_region
      // Predicated region
      $region17: #{tpu_custom_call.1} parent=15 // pred_check
        %p105 = pneg %p28
      $region18: #{tpu_custom_call.1} parent=15 // pred_check_branch
        %107 = sbr.rel (%p105) target = $region20
      $region19: #{tpu_custom_call.1} parent=15 // pred_region
        %s108 = smul.u32 2, %s8
        %p109 = scmp.lt.s32.totalorder %s108, 3
        %s110 = scalar_select %p109, %s108, 3
        %s111 = smul.addr %s110, 8
        %s112 = scalar_lea.vmem %s0, %s111
        %s113 = smul.u32 2, %s8
      $region20: #{tpu_custom_call.1} parent=15 // pred_fallthru
        _
      // Predicated region
      $region21: #{tpu_custom_call.1} parent=15 // pred_check
        %p114 = pneg %p54
      $region22: #{tpu_custom_call.1} parent=15 // pred_check_branch
        %116 = sbr.rel (%p114) target = $region24
      $region23: #{tpu_custom_call.1} parent=15 // pred_region
        %s117 = smul.u32 2, %s8
        %p118 = scmp.lt.s32.totalorder %s117, 3
        %s119 = scalar_select %p118, %s117, 3
        %s120 = smul.addr %s119, 8
        %s121 = scalar_lea.vmem %s1, %s120
        %s122 = smul.u32 2, %s8
      $region24: #{tpu_custom_call.1} parent=15 // pred_fallthru
        _
    $region16: #{tpu_custom_call.1} parent=5 // pred_fallthru
      _
    %p123 = scmp.le.s32.totalorder 1, %s8
    %p124 = scmp.lt.s32.totalorder %s8, 3
    %p125 = pnand %p123, %p124
    %p126 = pneg %p125
    // Predicated region
    $region25: #{tpu_custom_call.1} parent=5 // pred_check
      _
    $region26: #{tpu_custom_call.1} parent=5 // pred_check_branch
      %128 = sbr.rel (%p125) target = $region28
    $region27: #{tpu_custom_call.1} parent=5 // pred_region
      %s129 = ssub.s32 %s8, 1
      %s130 = smul.u32 2, %s13
      %p131 = scmp.lt.s32.totalorder %s130, 3
      %s132 = scalar_select %p131, %s130, 3
      %s133 = smul.addr %s132, 8
      %s134 = scalar_lea.vmem %s0, %s133
      %p135 = pneg %p34
      %p136 = pneg %p31
      %s137 = smul.u32 2, %s13
      %p138 = scmp.lt.s32.totalorder %s137, 3
      %s139 = scalar_select %p138, %s137, 3
      %s140 = smul.addr %s139, 8
      %s141 = scalar_lea.vmem %s1, %s140
      %p142 = pneg %p60
      %p143 = pneg %p57
      %p144 = pneg %p86
      %p145 = pneg %p83
      %s146 = smul.u32 2, %s13
      %p147 = scmp.lt.s32.totalorder %s146, 3
      %s148 = scalar_select %p147, %s146, 3
      %s149 = smul.addr %s148, 8
      %s150 = scalar_lea.vmem %s2, %s149
      %s151 = smul.u32 2, %s13
      %p152 = scmp.lt.s32.totalorder %s151, 3
      %s153 = scalar_select %p152, %s151, 3
      %s154 = smul.addr %s153, 8
      %s155 = scalar_lea.vmem %s0, %s154
      %s156 = smul.u32 2, %s13
      %s157 = smul.u32 2, %s13
      %p158 = scmp.lt.s32.totalorder %s157, 3
      %s159 = scalar_select %p158, %s157, 3
      %s160 = smul.addr %s159, 8
      %s161 = scalar_lea.vmem %s1, %s160
      %s162 = smul.u32 2, %s13
      %s163 = smul.u32 2, %s13
      %p164 = scmp.lt.s32.totalorder %s163, 3
      %s165 = scalar_select %p164, %s163, 3
      %s166 = smul.addr %s165, 8
      %s167 = scalar_lea.vmem %s2, %s166
      %s168 = smul.u32 2, %s13
      %v169 = vld [vmem:[%s155] sm:$0xff]
      %v170 = vld [vmem:[%s155 + $0x8] sm:$0xff]
      %v171 = vmul.f32 %v169, 0.5
      %v172 = vmul.f32 %v170, 0.5
      %v173 = vtanh.pop %v171
      %v174 = vtanh.pop %v172
      %v175 = vmul.f32 %v173, 0.5
      %v176 = vmul.f32 %v174, 0.5
      %v177 = vadd.f32 %v175, 0.5
      %v178 = vadd.f32 %v176, 0.5
      %v179 = vld [vmem:[%s161] sm:$0xff]
      %v180 = vld [vmem:[%s161 + $0x8] sm:$0xff]
      %vm181 = vcmp.eq.f32.partialorder %v179, 1.0
      %vm182 = vcmp.eq.f32.partialorder %v180, 1.0
      %v183 = vsel %vm181, 1, 0
      %v184 = vsel %vm182, 1, 0
      %v185 = vcvt.s32.f32 %v183
      %v186 = vcvt.s32.f32 %v184
      %v187 = vmul.f32 %v177, %v177
      %v188 = vmul.f32 %v178, %v178
      %vm189 = vcmask 130048
      %v190 = vsel %vm189, %v187, 0.0
      %191 = vadd.xlane.f32.xlu0 %v190
      %v192 = vpop.xlane.xlu0 %191
      %v193 = vsel %vm189, %v188, 0.0
      %194 = vadd.xlane.f32.xlu0 %v193
      %v195 = vpop.xlane.xlu0 %194
      %vm196 = vcmask 7168
      %197 = vst.msk [vmem:[%s167] sm:$0xff] %vm196, %v192
      %198 = vst.msk [vmem:[%s167 + $0x8] sm:$0xff] %vm196, %v195
      %v199 = vsel %vm189, %v185, 0.0
      %200 = vadd.xlane.f32.xlu0 %v199
      %v201 = vpop.xlane.xlu0 %200
      %v202 = vsel %vm189, %v186, 0.0
      %203 = vadd.xlane.f32.xlu0 %v202
      %v204 = vpop.xlane.xlu0 %203
      %vm205 = vcmask 15368
      %206 = vst.msk [vmem:[%s167] sm:$0xff] %vm205, %v201
      %207 = vst.msk [vmem:[%s167 + $0x8] sm:$0xff] %vm205, %v204
      %v208 = vmul.f32 %v185, %v177
      %v209 = vmul.f32 %v186, %v178
      %v210 = vsel %vm189, %v208, 0.0
      %211 = vadd.xlane.f32.xlu0 %v210
      %v212 = vpop.xlane.xlu0 %211
      %v213 = vsel %vm189, %v209, 0.0
      %214 = vadd.xlane.f32.xlu0 %v213
      %v215 = vpop.xlane.xlu0 %214
      %vm216 = vcmask 23568
      %217 = vst.msk [vmem:[%s167] sm:$0xff] %vm216, %v212
      %218 = vst.msk [vmem:[%s167 + $0x8] sm:$0xff] %vm216, %v215
      %s219 = smul.u32 2, %s13
      %p220 = scmp.lt.s32.totalorder %s219, 3
      %s221 = scalar_select %p220, %s219, 3
      %s222 = smul.addr %s221, 8
      %s223 = scalar_lea.vmem %s2, %s222
      // Predicated region
      $region29: #{tpu_custom_call.1} parent=27 // pred_check
        %p224 = pneg %p83
      $region30: #{tpu_custom_call.1} parent=27 // pred_check_branch
        %226 = sbr.rel (%p224) target = $region32
      $region31: #{tpu_custom_call.1} parent=27 // pred_region
        %s227 = smul.u32 2, %s13
      $region32: #{tpu_custom_call.1} parent=27 // pred_fallthru
        _
    $region28: #{tpu_custom_call.1} parent=5 // pred_fallthru
      _
    %p228 = scmp.le.s32.totalorder 2, %s8
    // Predicated region
    $region33: #{tpu_custom_call.1} parent=5 // pred_check
      %p229 = pneg %p228
    $region34: #{tpu_custom_call.1} parent=5 // pred_check_branch
      %231 = sbr.rel (%p229) target = $region36
    $region35: #{tpu_custom_call.1} parent=5 // pred_region
      %s232 = ssub.s32 %s8, 2
      // Predicated region
      $region37: #{tpu_custom_call.1} parent=35 // pred_check
        %p233 = pneg %p89
      $region38: #{tpu_custom_call.1} parent=35 // pred_check_branch
        %235 = sbr.rel (%p233) target = $region40
      $region39: #{tpu_custom_call.1} parent=35 // pred_region
        %s236 = smul.u32 2, %s14
        %p237 = scmp.lt.s32.totalorder %s236, 3
        %s238 = scalar_select %p237, %s236, 3
        %s239 = smul.addr %s238, 8
        %s240 = scalar_lea.vmem %s2, %s239
      $region40: #{tpu_custom_call.1} parent=35 // pred_fallthru
        _
    $region36: #{tpu_custom_call.1} parent=5 // pred_fallthru
      _
  $region6: #{tpu_custom_call.1} parent=0 // loop_footer
    %s12 = sadd.s32 1, %s8
  $region7: #{tpu_custom_call.1} parent=0 // loop_footer_branch
    %7 = sbr.rel target = $region3
  $region8: #{tpu_custom_call.1} parent=0 // loop_exit
    _

</llo_original>
